<compile_context>
chip_gen: v6e
topology: v6e:2x2x1
jax: 0.10.0
libtpu: 0.0.40
codegen_flags: <defaults>
</compile_context>

<pallas_src>
import functools

import jax
import jax.numpy as jnp
from jax.experimental import pallas as pl
from jax.experimental.pallas import tpu as pltpu


# ---------------------------------------------------------------------------
# Kernels
# ---------------------------------------------------------------------------

def _se_fused_kernel(rgb_ref, hsi_ref,
                     w1r_ref, b1r_ref, w2r_ref, b2r_ref,
                     w1h_ref, b1h_ref, w2h_ref, b2h_ref,
                     out_ref, *, inv_hw):
    """Fused SE over one (b_tile, C, HW) slab per stream."""

    def se_scale(x_ref, w1_ref, b1_ref, w2_ref, b2_ref):
        # squeeze: global average pool over spatial dim, accumulate in f32
        pooled = jnp.sum(x_ref[...].astype(jnp.float32), axis=2) * inv_hw    # (bt, C)
        # excitation MLP in f32 (weights stored (in, out): y = x @ W + b)
        h = jnp.dot(pooled, w1_ref[...].astype(jnp.float32),
                    preferred_element_type=jnp.float32)
        h = jnp.maximum(h + b1_ref[...].astype(jnp.float32), 0.0)           # ReLU
        s = jnp.dot(h, w2_ref[...].astype(jnp.float32),
                    preferred_element_type=jnp.float32)
        return jax.nn.sigmoid(s + b2_ref[...].astype(jnp.float32))          # (bt, C) f32

    s_r = se_scale(rgb_ref, w1r_ref, b1r_ref, w2r_ref, b2r_ref)
    s_h = se_scale(hsi_ref, w1h_ref, b1h_ref, w2h_ref, b2h_ref)

    # Elementwise pass as a single fused store; traffic stays in input dtype.
    out_ref[...] = (
        rgb_ref[...] * s_r[:, :, None].astype(rgb_ref.dtype)
        + hsi_ref[...] * s_h[:, :, None].astype(hsi_ref.dtype)
    ).astype(out_ref.dtype)


def _scale_sum_kernel(rgb_ref, hsi_ref, sr_ref, sh_ref, out_ref):
    """Spatially-tiled fallback: out = rgb * s_rgb + hsi * s_hsi (scales precomputed)."""
    out_ref[...] = (
        rgb_ref[...] * sr_ref[...].astype(rgb_ref.dtype)
        + hsi_ref[...] * sh_ref[...].astype(hsi_ref.dtype)
    ).astype(out_ref.dtype)


# ---------------------------------------------------------------------------
# VMEM budgeting helpers
# ---------------------------------------------------------------------------

def _physical_vmem_bytes():
    try:
        cap = getattr(pltpu.get_tpu_info(), "vmem_capacity_bytes", None)
        if cap:
            return int(cap)
    except Exception:
        pass
    return 64 * 1024 * 1024   # conservative default = v7x per-core VMEM


def _padded_block_bytes(d0, d1, dtype):
    """VMEM footprint of the trailing (d0, d1) dims of a block, lane/sublane padded."""
    itemsize = jnp.dtype(dtype).itemsize
    sublane = 8 * max(1, 4 // itemsize)          # 8 for f32, 16 for bf16, 32 for int8
    return pl.cdiv(d0, sublane) * sublane * pl.cdiv(d1, 128) * 128 * itemsize


# ---------------------------------------------------------------------------
# Wrapper
# ---------------------------------------------------------------------------

def se_layer(rgb, hsi, params, *, _force_spatial_tiling=False):
    """Forward pass of SELayer. Returns (rgb_scaled + hsi_scaled, 0.0)."""
    if rgb.shape != hsi.shape:
        # TODO(synk): F.interpolate(mode='bilinear', align_corners=False) path for
        # mismatched rgb/hsi spatial shapes is not implemented in-kernel.
        raise NotImplementedError("rgb and hsi must share shapes in this kernel")

    B, C, H, W = rgb.shape
    HW = H * W
    hidden_r = params["w1_rgb"].shape[1]
    hidden_h = params["w1_hsi"].shape[1]
    out_dtype = jnp.result_type(rgb.dtype, hsi.dtype)

    # Free, contiguous reshape; no wrapper-side dtype casts or transposes.
    rgb3 = rgb.reshape(B, C, HW)
    hsi3 = hsi.reshape(B, C, HW)

    w1r, b1r, w2r, b2r = (params[k] for k in ("w1_rgb", "b1_rgb", "w2_rgb", "b2_rgb"))
    w1h, b1h, w2h, b2h = (params[k] for k in ("w1_hsi", "b1_hsi", "w2_hsi", "b2_hsi"))
    weights = (w1r, b1r, w2r, b2r, w1h, b1h, w2h, b2h)
    weight_bytes = sum(int(w.size) * jnp.dtype(w.dtype).itemsize for w in weights)

    # Generation-aware VMEM budget: ~75% of physical (48 MiB v7x, 96 MiB v5e/v6e);
    # one third for the 6 double-buffered stream blocks, the rest is headroom for
    # elementwise/f32-cast temporaries, weights and compiler scratch.
    vmem_cap = (_physical_vmem_bytes() * 3) // 4
    block_budget = vmem_cap // 3

    # Padded (not logical) per-batch-row footprint of rgb + hsi + out blocks.
    per_batch = (_padded_block_bytes(C, HW, rgb3.dtype)
                 + _padded_block_bytes(C, HW, hsi3.dtype)
                 + _padded_block_bytes(C, HW, out_dtype))

    itemsizes = (jnp.dtype(rgb3.dtype).itemsize + jnp.dtype(hsi3.dtype).itemsize
                 + jnp.dtype(out_dtype).itemsize)
    cost = pl.CostEstimate(
        flops=int(4 * B * C * (hidden_r + hidden_h) + 3 * B * C * HW),
        transcendentals=int(2 * B * C),
        bytes_accessed=int(B * C * HW * itemsizes + 2 * weight_bytes),
    )

    b_tile_max = block_budget // (2 * per_batch)     # 2x: double-buffered pipeline

    if b_tile_max >= 1 and not _force_spatial_tiling:
        # ---- fused single-pass path: pool -> MLP -> rescale -> sum, one kernel ----
        # Keep a minimum grid depth (~8 steps) so DMA/compute overlap and v7x can
        # shard steps across both TensorCores.
        # TODO(synk): for B == 1 on v7x a second parallel grid axis (stream or
        # spatial split) would be needed to occupy both TensorCores.
        b_tile = max(1, min(B, b_tile_max, pl.cdiv(B, 8)))
        grid = (pl.cdiv(B, b_tile),)

        vmem_need = 4 * b_tile * per_batch + 2 * weight_bytes + (4 << 20)
        vmem_limit = int(min(max(vmem_need, 32 << 20), vmem_cap))

        stream_spec = pl.BlockSpec((b_tile, C, HW), lambda b: (b, 0, 0))
        full2 = lambda b: (0, 0)     # weights / biases: whole array every step

        kernel = functools.partial(_se_fused_kernel, inv_hw=1.0 / HW)
        out = pl.pallas_call(
            kernel,
            out_shape=jax.ShapeDtypeStruct((B, C, HW), out_dtype),
            grid=grid,
            in_specs=[
                stream_spec,                                   # rgb
                stream_spec,                                   # hsi
                pl.BlockSpec((C, hidden_r), full2),            # w1 rgb
                pl.BlockSpec((1, hidden_r), full2),            # b1 rgb
                pl.BlockSpec((hidden_r, C), full2),            # w2 rgb
                pl.BlockSpec((1, C), full2),                   # b2 rgb
                pl.BlockSpec((C, hidden_h), full2),            # w1 hsi
                pl.BlockSpec((1, hidden_h), full2),            # b1 hsi
                pl.BlockSpec((hidden_h, C), full2),            # w2 hsi
                pl.BlockSpec((1, C), full2),                   # b2 hsi
            ],
            out_specs=stream_spec,
            compiler_params=pltpu.CompilerParams(
                dimension_semantics=("parallel",),
                vmem_limit_bytes=vmem_limit,
            ),
            cost_estimate=cost,
        )(rgb3, hsi3, *weights)
    else:
        # ---- spatial-tiling fallback for feature maps too large for one slab ----
        # Pool + tiny excitation MLP in XLA (one extra read of each stream); the
        # bandwidth-heavy rescale + stream-sum is a Pallas kernel tiled over (B, HW).
        def excite(x3, w1, b1, w2, b2):
            pooled = jnp.mean(x3.astype(jnp.float32), axis=2)                     # (B, C)
            h = jnp.maximum(pooled @ w1.astype(jnp.float32)
                            + b1.astype(jnp.float32), 0.0)
            s = jax.nn.sigmoid(h @ w2.astype(jnp.float32) + b2.astype(jnp.float32))
            return s[:, :, None]                                                  # (B, C, 1)

        s_r = excite(rgb3, w1r, b1r, w2r, b2r)
        s_h = excite(hsi3, w1h, b1h, w2h, b2h)

        col_bytes = (_padded_block_bytes(C, 128, rgb3.dtype)
                     + _padded_block_bytes(C, 128, hsi3.dtype)
                     + _padded_block_bytes(C, 128, out_dtype))
        n_cols = max(1, block_budget // (2 * col_bytes))
        hw_tile = min(HW, n_cols * 128)
        if hw_tile < HW:
            hw_tile = max(128, (hw_tile // 128) * 128)       # lane-dense tiles
        grid = (B, pl.cdiv(HW, hw_tile))

        block_bytes = (_padded_block_bytes(C, hw_tile, rgb3.dtype)
                       + _padded_block_bytes(C, hw_tile, hsi3.dtype)
                       + _padded_block_bytes(C, hw_tile, out_dtype))
        vmem_limit = int(min(max(4 * block_bytes + (4 << 20), 32 << 20), vmem_cap))

        stream_spec = pl.BlockSpec((1, C, hw_tile), lambda b, h: (b, 0, h))
        scale_spec = pl.BlockSpec((1, C, 1), lambda b, h: (b, 0, 0))

        out = pl.pallas_call(
            _scale_sum_kernel,
            out_shape=jax.ShapeDtypeStruct((B, C, HW), out_dtype),
            grid=grid,
            in_specs=[stream_spec, stream_spec, scale_spec, scale_spec],
            out_specs=stream_spec,
            compiler_params=pltpu.CompilerParams(
                dimension_semantics=("parallel", "parallel"),
                vmem_limit_bytes=vmem_limit,
            ),
            cost_estimate=cost,
        )(rgb3, hsi3, s_r, s_h)

    return out.reshape(B, C, H, W), 0.0


# ---------------------------------------------------------------------------
# Parameters & reference
# ---------------------------------------------------------------------------

def init_params(key, channel_rgb, channel_hsi, reduction):
    h_rgb = channel_rgb // reduction
    h_hsi = channel_hsi // reduction
    ks = jax.random.split(key, 8)
    scale = 0.1
    return {
        # weights stored as (in_features, out_features): y = x @ W + b
        "w1_rgb": scale * jax.random.normal(ks[0], (channel_rgb, h_rgb), jnp.float32),
        "b1_rgb": scale * jax.random.normal(ks[1], (1, h_rgb), jnp.float32),
        "w2_rgb": scale * jax.random.normal(ks[2], (h_rgb, channel_rgb), jnp.float32),
        "b2_rgb": scale * jax.random.normal(ks[3], (1, channel_rgb), jnp.float32),
        "w1_hsi": scale * jax.random.normal(ks[4], (channel_hsi, h_hsi), jnp.float32),
        "b1_hsi": scale * jax.random.normal(ks[5], (1, h_hsi), jnp.float32),
        "w2_hsi": scale * jax.random.normal(ks[6], (h_hsi, channel_hsi), jnp.float32),
        "b2_hsi": scale * jax.random.normal(ks[7], (1, channel_hsi), jnp.float32),
    }


def _se_reference(x, w1, b1, w2, b2):
    xf = x.astype(jnp.float32)
    se = xf.mean(axis=(2, 3))                        # (B, C)
    h = jax.nn.relu(se @ w1 + b1[0])
    s = jax.nn.sigmoid(h @ w2 + b2[0])
    return xf * s[:, :, None, None]


if __name__ == "__main__":
    master_key = jax.random.PRNGKey(0)

    def run_case(B, C, H, W, reduction, dtype, atol, rtol, key, force_fallback=False):
        k_rgb, k_hsi, k_params = jax.random.split(key, 3)
        rgb = jax.random.normal(k_rgb, (B, C, H, W), jnp.float32).astype(dtype)
        hsi = jax.random.normal(k_hsi, (B, C, H, W), jnp.float32).astype(dtype)
        params = init_params(k_params, C, C, reduction)

        out, aux = se_layer(rgb, hsi, params, _force_spatial_tiling=force_fallback)
        out = jax.block_until_ready(out)

        assert out.shape == (B, C, H, W)
        assert out.dtype == dtype
        assert aux == 0.0

        ref = (_se_reference(rgb, params["w1_rgb"], params["b1_rgb"],
                             params["w2_rgb"], params["b2_rgb"])
               + _se_reference(hsi, params["w1_hsi"], params["b1_hsi"],
                               params["w2_hsi"], params["b2_hsi"]))
        assert jnp.allclose(out.astype(jnp.float32), ref, rtol=rtol, atol=atol), \
            f"mismatch vs reference (B={B}, C={C}, HW={H * W}, dtype={dtype})"

    k1, k2, k3, k4 = jax.random.split(master_key, 4)
    # fused path, f32 traffic
    run_case(2, 32, 8, 8, 4, jnp.float32, atol=1e-5, rtol=1e-5, key=k1)
    # fused path, bf16 traffic (output stays bf16)
    run_case(2, 32, 8, 8, 4, jnp.bfloat16, atol=1e-1, rtol=5e-2, key=k2)
    # narrow-HW late stage (HW=49 < 128): padded blocks, no wrapper transposes
    run_case(2, 128, 7, 7, 8, jnp.float32, atol=1e-5, rtol=1e-5, key=k3)
    # spatial-tiling fallback path (forced at a small shape to exercise it)
    run_case(2, 32, 8, 8, 4, jnp.float32, atol=1e-5, rtol=1e-5, key=k4,
             force_fallback=True)

    print("KERNEL_OK")
</pallas_src>

<mosaic_0001>
module attributes {stable_mosaic.version = 11 : i64} {
  func.func @_se_fused_kernel(%arg0: i32, %arg1: memref<1x32x64xf32, #tpu.memory_space<vmem>>, %arg2: memref<1x32x64xf32, #tpu.memory_space<vmem>>, %arg3: memref<32x8xf32, #tpu.memory_space<vmem>>, %arg4: memref<1x8xf32, #tpu.memory_space<vmem>>, %arg5: memref<8x32xf32, #tpu.memory_space<vmem>>, %arg6: memref<1x32xf32, #tpu.memory_space<vmem>>, %arg7: memref<32x8xf32, #tpu.memory_space<vmem>>, %arg8: memref<1x8xf32, #tpu.memory_space<vmem>>, %arg9: memref<8x32xf32, #tpu.memory_space<vmem>>, %arg10: memref<1x32xf32, #tpu.memory_space<vmem>>, %arg11: memref<1x32x64xf32, #tpu.memory_space<vmem>>) attributes {dimension_semantics = [#tpu.dimension_semantics<parallel>], iteration_bounds = array<i64: 2>, scalar_prefetch = 0 : i64, scratch_operands = 0 : i64, tpu.core_type = #tpu.core_type<tc>, window_params = [{transform_indices = @transform_0, window_bounds = array<i64: 1, 32, 64>}, {transform_indices = @transform_1, window_bounds = array<i64: 1, 32, 64>}, {pipeline_mode = #tpu.pipeline_mode<synchronous>, transform_indices = @transform_2, window_bounds = array<i64: 32, 8>}, {pipeline_mode = #tpu.pipeline_mode<synchronous>, transform_indices = @transform_3, window_bounds = array<i64: 1, 8>}, {pipeline_mode = #tpu.pipeline_mode<synchronous>, transform_indices = @transform_4, window_bounds = array<i64: 8, 32>}, {pipeline_mode = #tpu.pipeline_mode<synchronous>, transform_indices = @transform_5, window_bounds = array<i64: 1, 32>}, {pipeline_mode = #tpu.pipeline_mode<synchronous>, transform_indices = @transform_6, window_bounds = array<i64: 32, 8>}, {pipeline_mode = #tpu.pipeline_mode<synchronous>, transform_indices = @transform_7, window_bounds = array<i64: 1, 8>}, {pipeline_mode = #tpu.pipeline_mode<synchronous>, transform_indices = @transform_8, window_bounds = array<i64: 8, 32>}, {pipeline_mode = #tpu.pipeline_mode<synchronous>, transform_indices = @transform_9, window_bounds = array<i64: 1, 32>}, {transform_indices = @transform_10, window_bounds = array<i64: 1, 32, 64>}]} {
    %c0 = arith.constant 0 : index
    %c0_0 = arith.constant 0 : index
    %c0_1 = arith.constant 0 : index
    %0 = vector.load %arg1[%c0, %c0_0, %c0_1] : memref<1x32x64xf32, #tpu.memory_space<vmem>>, vector<1x32x64xf32>
    %cst = arith.constant dense<0.000000e+00> : vector<1x32xf32>
    %1 = vector.multi_reduction <add>, %0, %cst [2] : vector<1x32x64xf32> to vector<1x32xf32>
    %cst_2 = arith.constant 1.562500e-02 : f32
    %2 = vector.broadcast %cst_2 : f32 to vector<1x32xf32>
    %3 = arith.mulf %1, %2 : vector<1x32xf32>
    %c0_3 = arith.constant 0 : index
    %c0_4 = arith.constant 0 : index
    %4 = vector.load %arg3[%c0_3, %c0_4] : memref<32x8xf32, #tpu.memory_space<vmem>>, vector<32x8xf32>
    %cst_5 = arith.constant dense<0.000000e+00> : vector<1x8xf32>
    %5 = tpu.matmul %3, %4, %cst_5 {dimension_numbers = #tpu.dot_dimension_numbers<[1], [0], [0], [1], [0, 0, 1, 1], [], []>} : vector<1x32xf32>, vector<32x8xf32>, vector<1x8xf32> -> vector<1x8xf32>
    %c0_6 = arith.constant 0 : index
    %c0_7 = arith.constant 0 : index
    %6 = vector.load %arg4[%c0_6, %c0_7] : memref<1x8xf32, #tpu.memory_space<vmem>>, vector<1x8xf32>
    %7 = arith.addf %5, %6 : vector<1x8xf32>
    %cst_8 = arith.constant 0.000000e+00 : f32
    %8 = vector.broadcast %cst_8 : f32 to vector<1x8xf32>
    %9 = arith.maximumf %7, %8 : vector<1x8xf32>
    %c0_9 = arith.constant 0 : index
    %c0_10 = arith.constant 0 : index
    %10 = vector.load %arg5[%c0_9, %c0_10] : memref<8x32xf32, #tpu.memory_space<vmem>>, vector<8x32xf32>
    %cst_11 = arith.constant dense<0.000000e+00> : vector<1x32xf32>
    %11 = tpu.matmul %9, %10, %cst_11 {dimension_numbers = #tpu.dot_dimension_numbers<[1], [0], [0], [1], [0, 0, 1, 1], [], []>} : vector<1x8xf32>, vector<8x32xf32>, vector<1x32xf32> -> vector<1x32xf32>
    %c0_12 = arith.constant 0 : index
    %c0_13 = arith.constant 0 : index
    %12 = vector.load %arg6[%c0_12, %c0_13] : memref<1x32xf32, #tpu.memory_space<vmem>>, vector<1x32xf32>
    %13 = arith.addf %11, %12 : vector<1x32xf32>
    %14 = arith.negf %13 : vector<1x32xf32>
    %15 = math.exp %14 : vector<1x32xf32>
    %cst_14 = arith.constant 1.000000e+00 : f32
    %16 = vector.broadcast %cst_14 : f32 to vector<1x32xf32>
    %17 = arith.addf %16, %15 : vector<1x32xf32>
    %18 = arith.divf %16, %17 : vector<1x32xf32>
    %c0_15 = arith.constant 0 : index
    %c0_16 = arith.constant 0 : index
    %c0_17 = arith.constant 0 : index
    %19 = vector.load %arg2[%c0_15, %c0_16, %c0_17] : memref<1x32x64xf32, #tpu.memory_space<vmem>>, vector<1x32x64xf32>
    %cst_18 = arith.constant dense<0.000000e+00> : vector<1x32xf32>
    %20 = vector.multi_reduction <add>, %19, %cst_18 [2] : vector<1x32x64xf32> to vector<1x32xf32>
    %cst_19 = arith.constant 1.562500e-02 : f32
    %21 = vector.broadcast %cst_19 : f32 to vector<1x32xf32>
    %22 = arith.mulf %20, %21 : vector<1x32xf32>
    %c0_20 = arith.constant 0 : index
    %c0_21 = arith.constant 0 : index
    %23 = vector.load %arg7[%c0_20, %c0_21] : memref<32x8xf32, #tpu.memory_space<vmem>>, vector<32x8xf32>
    %cst_22 = arith.constant dense<0.000000e+00> : vector<1x8xf32>
    %24 = tpu.matmul %22, %23, %cst_22 {dimension_numbers = #tpu.dot_dimension_numbers<[1], [0], [0], [1], [0, 0, 1, 1], [], []>} : vector<1x32xf32>, vector<32x8xf32>, vector<1x8xf32> -> vector<1x8xf32>
    %c0_23 = arith.constant 0 : index
    %c0_24 = arith.constant 0 : index
    %25 = vector.load %arg8[%c0_23, %c0_24] : memref<1x8xf32, #tpu.memory_space<vmem>>, vector<1x8xf32>
    %26 = arith.addf %24, %25 : vector<1x8xf32>
    %cst_25 = arith.constant 0.000000e+00 : f32
    %27 = vector.broadcast %cst_25 : f32 to vector<1x8xf32>
    %28 = arith.maximumf %26, %27 : vector<1x8xf32>
    %c0_26 = arith.constant 0 : index
    %c0_27 = arith.constant 0 : index
    %29 = vector.load %arg9[%c0_26, %c0_27] : memref<8x32xf32, #tpu.memory_space<vmem>>, vector<8x32xf32>
    %cst_28 = arith.constant dense<0.000000e+00> : vector<1x32xf32>
    %30 = tpu.matmul %28, %29, %cst_28 {dimension_numbers = #tpu.dot_dimension_numbers<[1], [0], [0], [1], [0, 0, 1, 1], [], []>} : vector<1x8xf32>, vector<8x32xf32>, vector<1x32xf32> -> vector<1x32xf32>
    %c0_29 = arith.constant 0 : index
    %c0_30 = arith.constant 0 : index
    %31 = vector.load %arg10[%c0_29, %c0_30] : memref<1x32xf32, #tpu.memory_space<vmem>>, vector<1x32xf32>
    %32 = arith.addf %30, %31 : vector<1x32xf32>
    %33 = arith.negf %32 : vector<1x32xf32>
    %34 = math.exp %33 : vector<1x32xf32>
    %cst_31 = arith.constant 1.000000e+00 : f32
    %35 = vector.broadcast %cst_31 : f32 to vector<1x32xf32>
    %36 = arith.addf %35, %34 : vector<1x32xf32>
    %37 = arith.divf %35, %36 : vector<1x32xf32>
    %c0_32 = arith.constant 0 : index
    %c0_33 = arith.constant 0 : index
    %c0_34 = arith.constant 0 : index
    %38 = vector.load %arg1[%c0_32, %c0_33, %c0_34] : memref<1x32x64xf32, #tpu.memory_space<vmem>>, vector<1x32x64xf32>
    %39 = vector.shape_cast %18 : vector<1x32xf32> to vector<1x32x1xf32>
    %40 = vector.broadcast %39 : vector<1x32x1xf32> to vector<1x32x64xf32>
    %41 = arith.mulf %38, %40 : vector<1x32x64xf32>
    %c0_35 = arith.constant 0 : index
    %c0_36 = arith.constant 0 : index
    %c0_37 = arith.constant 0 : index
    %42 = vector.load %arg2[%c0_35, %c0_36, %c0_37] : memref<1x32x64xf32, #tpu.memory_space<vmem>>, vector<1x32x64xf32>
    %43 = vector.shape_cast %37 : vector<1x32xf32> to vector<1x32x1xf32>
    %44 = vector.broadcast %43 : vector<1x32x1xf32> to vector<1x32x64xf32>
    %45 = arith.mulf %42, %44 : vector<1x32x64xf32>
    %46 = arith.addf %41, %45 : vector<1x32x64xf32>
    %c0_38 = arith.constant 0 : index
    %c0_39 = arith.constant 0 : index
    %c0_40 = arith.constant 0 : index
    %47 = vector.load %arg11[%c0_38, %c0_39, %c0_40] : memref<1x32x64xf32, #tpu.memory_space<vmem>>, vector<1x32x64xf32>
    tpu.vector_store %arg11[%c0_38, %c0_39, %c0_40], %46 {strides = array<i32>} : memref<1x32x64xf32, #tpu.memory_space<vmem>>, vector<1x32x64xf32>,
    return
  }
  func.func @transform_0(%arg0: i32) -> (i32, i32, i32) {
    %c0_i32 = arith.constant 0 : i32
    %c0_i32_0 = arith.constant 0 : i32
    %c0_i32_1 = arith.constant 0 : i32
    return %arg0, %c0_i32, %c0_i32_0 : i32, i32, i32
  }
  func.func @transform_1(%arg0: i32) -> (i32, i32, i32) {
    %c0_i32 = arith.constant 0 : i32
    %c0_i32_0 = arith.constant 0 : i32
    %c0_i32_1 = arith.constant 0 : i32
    return %arg0, %c0_i32, %c0_i32_0 : i32, i32, i32
  }
  func.func @transform_2(%arg0: i32) -> (i32, i32) {
    %c0_i32 = arith.constant 0 : i32
    %c0_i32_0 = arith.constant 0 : i32
    %c0_i32_1 = arith.constant 0 : i32
    return %c0_i32, %c0_i32_0 : i32, i32
  }
  func.func @transform_3(%arg0: i32) -> (i32, i32) {
    %c0_i32 = arith.constant 0 : i32
    %c0_i32_0 = arith.constant 0 : i32
    %c0_i32_1 = arith.constant 0 : i32
    return %c0_i32, %c0_i32_0 : i32, i32
  }
  func.func @transform_4(%arg0: i32) -> (i32, i32) {
    %c0_i32 = arith.constant 0 : i32
    %c0_i32_0 = arith.constant 0 : i32
    %c0_i32_1 = arith.constant 0 : i32
    return %c0_i32, %c0_i32_0 : i32, i32
  }
  func.func @transform_5(%arg0: i32) -> (i32, i32) {
    %c0_i32 = arith.constant 0 : i32
    %c0_i32_0 = arith.constant 0 : i32
    %c0_i32_1 = arith.constant 0 : i32
    return %c0_i32, %c0_i32_0 : i32, i32
  }
  func.func @transform_6(%arg0: i32) -> (i32, i32) {
    %c0_i32 = arith.constant 0 : i32
    %c0_i32_0 = arith.constant 0 : i32
    %c0_i32_1 = arith.constant 0 : i32
    return %c0_i32, %c0_i32_0 : i32, i32
  }
  func.func @transform_7(%arg0: i32) -> (i32, i32) {
    %c0_i32 = arith.constant 0 : i32
    %c0_i32_0 = arith.constant 0 : i32
    %c0_i32_1 = arith.constant 0 : i32
    return %c0_i32, %c0_i32_0 : i32, i32
  }
  func.func @transform_8(%arg0: i32) -> (i32, i32) {
    %c0_i32 = arith.constant 0 : i32
    %c0_i32_0 = arith.constant 0 : i32
    %c0_i32_1 = arith.constant 0 : i32
    return %c0_i32, %c0_i32_0 : i32, i32
  }
  func.func @transform_9(%arg0: i32) -> (i32, i32) {
    %c0_i32 = arith.constant 0 : i32
    %c0_i32_0 = arith.constant 0 : i32
    %c0_i32_1 = arith.constant 0 : i32
    return %c0_i32, %c0_i32_0 : i32, i32
  }
  func.func @transform_10(%arg0: i32) -> (i32, i32, i32) {
    %c0_i32 = arith.constant 0 : i32
    %c0_i32_0 = arith.constant 0 : i32
    %c0_i32_1 = arith.constant 0 : i32
    return %arg0, %c0_i32, %c0_i32_0 : i32, i32, i32
  }
}

</mosaic_0001>

<llo_original>
// kernel: tpu_custom_call.1
$region0: #{tpu_custom_call.1}
  #allocation0 [shape = 'u32[]', space=smem, size = 0x4, offset = 0x4, fixed_abs, tag = 'smem constant byte address 0x4 - core index']
  #allocation1 [shape = 'u32[144,128]{1,0:T(1,128)}', space=vmem, size = 0x12000, scoped, tag = 'internal scratch']
  %s0 = inlined_call_operand.vmem [shape: f32[2,32,64], index: 0, kind: input, shape index: {}]
  %s1 = inlined_call_operand.hbm [shape: f32[2,32,64], index: 1, kind: input, shape index: {}]
  %s2 = inlined_call_operand.vmem [shape: f32[32,8], index: 2, kind: input, shape index: {}]
  %s3 = inlined_call_operand.vmem [shape: f32[1,8], index: 3, kind: input, shape index: {}]
  %s4 = inlined_call_operand.vmem [shape: f32[8,32], index: 4, kind: input, shape index: {}]
  %s5 = inlined_call_operand.hbm [shape: f32[1,32], index: 5, kind: input, shape index: {}]
  %s6 = inlined_call_operand.vmem [shape: f32[32,8], index: 6, kind: input, shape index: {}]
  %s7 = inlined_call_operand.vmem [shape: f32[1,8], index: 7, kind: input, shape index: {}]
  %s8 = inlined_call_operand.vmem [shape: f32[8,32], index: 8, kind: input, shape index: {}]
  %s9 = inlined_call_operand.vmem [shape: f32[1,32], index: 9, kind: input, shape index: {}]
  %s10 = inlined_call_operand.hbm [shape: f32[2,32,64], index: 10, kind: output, shape index: {}]
  %s11 = sld [smem:[#allocation0]]
  $region81: #{tpu_custom_call.1} parent=0
    _
  %s13 = ssub.s32 1, %s11
  %s14 = scalar_select 0, %s13, %s11
  $region1: #{tpu_custom_call.1} parent=0
    #allocation2 [shape = 'u8[32768]{0}', space=vmem, size = 0x8000, scoped, tag = 'input window, operand 1']
    #allocation3 [shape = 's32[2]{0}', space=sflag, size = 0x8, scoped, tag = 'scoped memory for tpu_custom_call.1']
    #allocation4 [shape = 's32[2]{0}', space=sflag, size = 0x8, scoped, tag = 'scoped memory for tpu_custom_call.1']
    #allocation5 [shape = 'u8[512]{0}', space=vmem, size = 0x400, scoped, tag = 'input window, operand 5, single buffered']
    #allocation6 [shape = 's32[1]{0}', space=sflag, size = 0x4, scoped, tag = 'scoped memory for tpu_custom_call.1']
    #allocation7 [shape = 'u8[32768]{0}', space=vmem, size = 0x8000, scoped, tag = 'output window, operand 0']
    %15 = vsyncpa [#allocation3], 0
    %s16 = scalar_lea.sflag [#allocation3], 1
    %17 = vsyncpa %s16, 0
    %18 = vsyncpa [#allocation6], 0
    %19 = vsyncpa [#allocation4], 0
    %s20 = scalar_lea.sflag [#allocation4], 1
    %21 = vsyncpa %s20, 0
    loop: start=0, step=1, limit=4
    $region2: #{tpu_custom_call.1} parent=1 // loop_pre_header
      _
    $region3: #{tpu_custom_call.1} parent=1 // loop_header
      %s23 = sphi 0, %s27
      %p24 = scmp.ge.s32.totalorder %s23, 4
      %s33 = sphi 0, %s35
      %s36 = sphi 0, %s33
      %s37 = sphi 0, %s36
      %s53 = sphi 0, %s37
      %s59 = sphi 0, %s61
      %s62 = sphi 0, %s59
      %s63 = sphi 0, %s62
      %s79 = sphi 0, %s63
      %s83 = sphi 0, %s83
      %s85 = sphi 0, %s83
      %s86 = sphi 0, %s85
      %s100 = sphi 0, %s86
      %s104 = sphi 0, %s104
      %s106 = sphi 0, %s104
      %s107 = sphi 0, %s106
      %s121 = sphi 0, %s107
      %s125 = sphi 0, %s125
      %s127 = sphi 0, %s125
      %s128 = sphi 0, %s127
      %s142 = sphi 0, %s128
      %s146 = sphi 0, %s146
      %s148 = sphi 0, %s146
      %s149 = sphi 0, %s148
      %s163 = sphi 0, %s149
      %s167 = sphi 0, %s167
      %s169 = sphi 0, %s167
      %s170 = sphi 0, %s169
      %s184 = sphi 0, %s170
      %s188 = sphi 0, %s188
      %s190 = sphi 0, %s188
      %s191 = sphi 0, %s190
      %s205 = sphi 0, %s191
      %s209 = sphi 0, %s209
      %s211 = sphi 0, %s209
      %s212 = sphi 0, %s211
      %s226 = sphi 0, %s212
      %s230 = sphi 0, %s230
      %s232 = sphi 0, %s230
      %s233 = sphi 0, %s232
      %s247 = sphi 0, %s233
      %s253 = sphi 0, %s255
      %s256 = sphi 0, %s253
      %s257 = sphi 0, %s256
      %s273 = sphi 0, %s257
    $region4: #{tpu_custom_call.1} parent=1 // loop_header_branch
      %26 = sbr.rel (%p24) target = $region8
    $region5: #{tpu_custom_call.1} parent=1 // loop_body
      %s28 = ssub.s32 %s23, 1
      %s29 = ssub.s32 %s23, 2
      %s30 = sadd.s32 %s23, 1
      %s31 = ssub.s32 %s23, %s30
      %p32 = scmp.eq.s32.totalorder %s31, 0
      %s34 = sadd.s32 %s33, 1
      %s35 = scalar_select %p32, %s33, %s34
      %p38 = pneg %p32
      %p39 = scmp.eq.s32.totalorder %s23, 1
      %p40 = por %p38, %p39
      %p41 = scmp.ne.s32.totalorder %s33, %s36
      %p42 = scmp.eq.s32.totalorder %s23, 0
      %p43 = por %p41, %p42
      %p44 = scmp.ne.s32.totalorder %s33, %s36
      %p45 = scmp.eq.s32.totalorder %s28, 1
      %p46 = por %p44, %p45
      %p47 = scmp.ne.s32.totalorder %s36, %s37
      %p48 = scmp.eq.s32.totalorder %s28, 0
      %p49 = por %p47, %p48
      %p50 = scmp.ne.s32.totalorder %s36, %s37
      %p51 = scmp.eq.s32.totalorder %s29, 1
      %p52 = por %p50, %p51
      %p54 = scmp.ne.s32.totalorder %s37, %s53
      %p55 = scmp.eq.s32.totalorder %s29, 0
      %p56 = por %p54, %p55
      %s57 = ssub.s32 %s23, %s30
      %p58 = scmp.eq.s32.totalorder %s57, 0
      %s60 = sadd.s32 %s59, 1
      %s61 = scalar_select %p58, %s59, %s60
      %p64 = pneg %p58
      %p65 = scmp.eq.s32.totalorder %s23, 1
      %p66 = por %p64, %p65
      %p67 = scmp.ne.s32.totalorder %s59, %s62
      %p68 = scmp.eq.s32.totalorder %s23, 0
      %p69 = por %p67, %p68
      %p70 = scmp.ne.s32.totalorder %s59, %s62
      %p71 = scmp.eq.s32.totalorder %s28, 1
      %p72 = por %p70, %p71
      %p73 = scmp.ne.s32.totalorder %s62, %s63
      %p74 = scmp.eq.s32.totalorder %s28, 0
      %p75 = por %p73, %p74
      %p76 = scmp.ne.s32.totalorder %s62, %s63
      %p77 = scmp.eq.s32.totalorder %s29, 1
      %p78 = por %p76, %p77
      %p80 = scmp.ne.s32.totalorder %s63, %s79
      %p81 = scmp.eq.s32.totalorder %s29, 0
      %p82 = por %p80, %p81
      %s84 = sadd.s32 %s83, 1
      %p87 = scmp.eq.s32.totalorder %s23, 1
      %p88 = scmp.ne.s32.totalorder %s83, %s85
      %p89 = scmp.eq.s32.totalorder %s23, 0
      %p90 = por %p88, %p89
      %p91 = scmp.ne.s32.totalorder %s83, %s85
      %p92 = scmp.eq.s32.totalorder %s28, 1
      %p93 = por %p91, %p92
      %p94 = scmp.ne.s32.totalorder %s85, %s86
      %p95 = scmp.eq.s32.totalorder %s28, 0
      %p96 = por %p94, %p95
      %p97 = scmp.ne.s32.totalorder %s85, %s86
      %p98 = scmp.eq.s32.totalorder %s29, 1
      %p99 = por %p97, %p98
      %p101 = scmp.ne.s32.totalorder %s86, %s100
      %p102 = scmp.eq.s32.totalorder %s29, 0
      %p103 = por %p101, %p102
      %s105 = sadd.s32 %s104, 1
      %p108 = scmp.eq.s32.totalorder %s23, 1
      %p109 = scmp.ne.s32.totalorder %s104, %s106
      %p110 = scmp.eq.s32.totalorder %s23, 0
      %p111 = por %p109, %p110
      %p112 = scmp.ne.s32.totalorder %s104, %s106
      %p113 = scmp.eq.s32.totalorder %s28, 1
      %p114 = por %p112, %p113
      %p115 = scmp.ne.s32.totalorder %s106, %s107
      %p116 = scmp.eq.s32.totalorder %s28, 0
      %p117 = por %p115, %p116
      %p118 = scmp.ne.s32.totalorder %s106, %s107
      %p119 = scmp.eq.s32.totalorder %s29, 1
      %p120 = por %p118, %p119
      %p122 = scmp.ne.s32.totalorder %s107, %s121
      %p123 = scmp.eq.s32.totalorder %s29, 0
      %p124 = por %p122, %p123
      %s126 = sadd.s32 %s125, 1
      %p129 = scmp.eq.s32.totalorder %s23, 1
      %p130 = scmp.ne.s32.totalorder %s125, %s127
      %p131 = scmp.eq.s32.totalorder %s23, 0
      %p132 = por %p130, %p131
      %p133 = scmp.ne.s32.totalorder %s125, %s127
      %p134 = scmp.eq.s32.totalorder %s28, 1
      %p135 = por %p133, %p134
      %p136 = scmp.ne.s32.totalorder %s127, %s128
      %p137 = scmp.eq.s32.totalorder %s28, 0
      %p138 = por %p136, %p137
      %p139 = scmp.ne.s32.totalorder %s127, %s128
      %p140 = scmp.eq.s32.totalorder %s29, 1
      %p141 = por %p139, %p140
      %p143 = scmp.ne.s32.totalorder %s128, %s142
      %p144 = scmp.eq.s32.totalorder %s29, 0
      %p145 = por %p143, %p144
      %s147 = sadd.s32 %s146, 1
      %p150 = scmp.eq.s32.totalorder %s23, 1
      %p151 = scmp.ne.s32.totalorder %s146, %s148
      %p152 = scmp.eq.s32.totalorder %s23, 0
      %p153 = por %p151, %p152
      %p154 = scmp.ne.s32.totalorder %s146, %s148
      %p155 = scmp.eq.s32.totalorder %s28, 1
      %p156 = por %p154, %p155
      %p157 = scmp.ne.s32.totalorder %s148, %s149
      %p158 = scmp.eq.s32.totalorder %s28, 0
      %p159 = por %p157, %p158
      %p160 = scmp.ne.s32.totalorder %s148, %s149
      %p161 = scmp.eq.s32.totalorder %s29, 1
      %p162 = por %p160, %p161
      %p164 = scmp.ne.s32.totalorder %s149, %s163
      %p165 = scmp.eq.s32.totalorder %s29, 0
      %p166 = por %p164, %p165
      %s168 = sadd.s32 %s167, 1
      %p171 = scmp.eq.s32.totalorder %s23, 1
      %p172 = scmp.ne.s32.totalorder %s167, %s169
      %p173 = scmp.eq.s32.totalorder %s23, 0
      %p174 = por %p172, %p173
      %p175 = scmp.ne.s32.totalorder %s167, %s169
      %p176 = scmp.eq.s32.totalorder %s28, 1
      %p177 = por %p175, %p176
      %p178 = scmp.ne.s32.totalorder %s169, %s170
      %p179 = scmp.eq.s32.totalorder %s28, 0
      %p180 = por %p178, %p179
      %p181 = scmp.ne.s32.totalorder %s169, %s170
      %p182 = scmp.eq.s32.totalorder %s29, 1
      %p183 = por %p181, %p182
      %p185 = scmp.ne.s32.totalorder %s170, %s184
      %p186 = scmp.eq.s32.totalorder %s29, 0
      %p187 = por %p185, %p186
      %s189 = sadd.s32 %s188, 1
      %p192 = scmp.eq.s32.totalorder %s23, 1
      %p193 = scmp.ne.s32.totalorder %s188, %s190
      %p194 = scmp.eq.s32.totalorder %s23, 0
      %p195 = por %p193, %p194
      %p196 = scmp.ne.s32.totalorder %s188, %s190
      %p197 = scmp.eq.s32.totalorder %s28, 1
      %p198 = por %p196, %p197
      %p199 = scmp.ne.s32.totalorder %s190, %s191
      %p200 = scmp.eq.s32.totalorder %s28, 0
      %p201 = por %p199, %p200
      %p202 = scmp.ne.s32.totalorder %s190, %s191
      %p203 = scmp.eq.s32.totalorder %s29, 1
      %p204 = por %p202, %p203
      %p206 = scmp.ne.s32.totalorder %s191, %s205
      %p207 = scmp.eq.s32.totalorder %s29, 0
      %p208 = por %p206, %p207
      %s210 = sadd.s32 %s209, 1
      %p213 = scmp.eq.s32.totalorder %s23, 1
      %p214 = scmp.ne.s32.totalorder %s209, %s211
      %p215 = scmp.eq.s32.totalorder %s23, 0
      %p216 = por %p214, %p215
      %p217 = scmp.ne.s32.totalorder %s209, %s211
      %p218 = scmp.eq.s32.totalorder %s28, 1
      %p219 = por %p217, %p218
      %p220 = scmp.ne.s32.totalorder %s211, %s212
      %p221 = scmp.eq.s32.totalorder %s28, 0
      %p222 = por %p220, %p221
      %p223 = scmp.ne.s32.totalorder %s211, %s212
      %p224 = scmp.eq.s32.totalorder %s29, 1
      %p225 = por %p223, %p224
      %p227 = scmp.ne.s32.totalorder %s212, %s226
      %p228 = scmp.eq.s32.totalorder %s29, 0
      %p229 = por %p227, %p228
      %s231 = sadd.s32 %s230, 1
      %p234 = scmp.eq.s32.totalorder %s23, 1
      %p235 = scmp.ne.s32.totalorder %s230, %s232
      %p236 = scmp.eq.s32.totalorder %s23, 0
      %p237 = por %p235, %p236
      %p238 = scmp.ne.s32.totalorder %s230, %s232
      %p239 = scmp.eq.s32.totalorder %s28, 1
      %p240 = por %p238, %p239
      %p241 = scmp.ne.s32.totalorder %s232, %s233
      %p242 = scmp.eq.s32.totalorder %s28, 0
      %p243 = por %p241, %p242
      %p244 = scmp.ne.s32.totalorder %s232, %s233
      %p245 = scmp.eq.s32.totalorder %s29, 1
      %p246 = por %p244, %p245
      %p248 = scmp.ne.s32.totalorder %s233, %s247
      %p249 = scmp.eq.s32.totalorder %s29, 0
      %p250 = por %p248, %p249
      %s251 = ssub.s32 %s23, %s30
      %p252 = scmp.eq.s32.totalorder %s251, 0
      %s254 = sadd.s32 %s253, 1
      %s255 = scalar_select %p252, %s253, %s254
      %p258 = pneg %p252
      %p259 = scmp.eq.s32.totalorder %s23, 1
      %p260 = por %p258, %p259
      %p261 = scmp.ne.s32.totalorder %s253, %s256
      %p262 = scmp.eq.s32.totalorder %s23, 0
      %p263 = por %p261, %p262
      %p264 = scmp.ne.s32.totalorder %s253, %s256
      %p265 = scmp.eq.s32.totalorder %s28, 1
      %p266 = por %p264, %p265
      %p267 = scmp.ne.s32.totalorder %s256, %s257
      %p268 = scmp.eq.s32.totalorder %s28, 0
      %p269 = por %p267, %p268
      %p270 = scmp.ne.s32.totalorder %s256, %s257
      %p271 = scmp.eq.s32.totalorder %s29, 1
      %p272 = por %p270, %p271
      %p274 = scmp.ne.s32.totalorder %s257, %s273
      %p275 = scmp.eq.s32.totalorder %s29, 0
      %p276 = por %p274, %p275
      %p277 = scmp.le.s32.totalorder 1, %s23
      %p278 = scmp.lt.s32.totalorder %s23, 3
      %p279 = pnand %p277, %p278
      %p280 = pneg %p279
      // Predicated region
      $region9: #{tpu_custom_call.1} parent=5 // pred_check
        _
      $region10: #{tpu_custom_call.1} parent=5 // pred_check_branch
        %282 = sbr.rel (%p279) target = $region12
      $region11: #{tpu_custom_call.1} parent=5 // pred_region
        %s283 = ssub.s32 %s23, 1
        // Predicated region
        $region13: #{tpu_custom_call.1} parent=11 // pred_check
          %p284 = pneg %p96
        $region14: #{tpu_custom_call.1} parent=11 // pred_check_branch
          %286 = sbr.rel (%p284) target = $region16
        $region15: #{tpu_custom_call.1} parent=11 // pred_region
          _
        $region16: #{tpu_custom_call.1} parent=11 // pred_fallthru
          _
        // Predicated region
        $region17: #{tpu_custom_call.1} parent=11 // pred_check
          %p287 = pneg %p117
        $region18: #{tpu_custom_call.1} parent=11 // pred_check_branch
          %289 = sbr.rel (%p287) target = $region20
        $region19: #{tpu_custom_call.1} parent=11 // pred_region
          _
        $region20: #{tpu_custom_call.1} parent=11 // pred_fallthru
          _
        // Predicated region
        $region21: #{tpu_custom_call.1} parent=11 // pred_check
          %p290 = pneg %p138
        $region22: #{tpu_custom_call.1} parent=11 // pred_check_branch
          %292 = sbr.rel (%p290) target = $region24
        $region23: #{tpu_custom_call.1} parent=11 // pred_region
          _
        $region24: #{tpu_custom_call.1} parent=11 // pred_fallthru
          _
        // Predicated region
        $region25: #{tpu_custom_call.1} parent=11 // pred_check
          %p293 = pneg %p159
        $region26: #{tpu_custom_call.1} parent=11 // pred_check_branch
          %295 = sbr.rel (%p293) target = $region28
        $region27: #{tpu_custom_call.1} parent=11 // pred_region
          %s297 = ssub.s32 16, 16
          %298 = vsyncadd [#allocation6], %s297
          %s300 = sshll.u32 [#allocation5], 4
          %s301 = int_to_ptr.vmem [resolvable:$true] %s300
          %303 = dma.hbm_to_vmem [thread:$0]  %s5, 16, %s301, [#allocation6]
        $region28: #{tpu_custom_call.1} parent=11 // pred_fallthru
          _
        // Predicated region
        $region29: #{tpu_custom_call.1} parent=11 // pred_check
          %p304 = pneg %p180
        $region30: #{tpu_custom_call.1} parent=11 // pred_check_branch
          %306 = sbr.rel (%p304) target = $region32
        $region31: #{tpu_custom_call.1} parent=11 // pred_region
          _
        $region32: #{tpu_custom_call.1} parent=11 // pred_fallthru
          _
        // Predicated region
        $region33: #{tpu_custom_call.1} parent=11 // pred_check
          %p307 = pneg %p201
        $region34: #{tpu_custom_call.1} parent=11 // pred_check_branch
          %309 = sbr.rel (%p307) target = $region36
        $region35: #{tpu_custom_call.1} parent=11 // pred_region
          _
        $region36: #{tpu_custom_call.1} parent=11 // pred_fallthru
          _
        // Predicated region
        $region37: #{tpu_custom_call.1} parent=11 // pred_check
          %p310 = pneg %p222
        $region38: #{tpu_custom_call.1} parent=11 // pred_check_branch
          %312 = sbr.rel (%p310) target = $region40
        $region39: #{tpu_custom_call.1} parent=11 // pred_region
          _
        $region40: #{tpu_custom_call.1} parent=11 // pred_fallthru
          _
        // Predicated region
        $region41: #{tpu_custom_call.1} parent=11 // pred_check
          %p313 = pneg %p243
        $region42: #{tpu_custom_call.1} parent=11 // pred_check_branch
          %315 = sbr.rel (%p313) target = $region44
        $region43: #{tpu_custom_call.1} parent=11 // pred_region
          _
        $region44: #{tpu_custom_call.1} parent=11 // pred_fallthru
          _
      $region12: #{tpu_custom_call.1} parent=5 // pred_fallthru
        _
      %p316 = scmp.lt.s32.totalorder %s23, 2
      // Predicated region
      $region45: #{tpu_custom_call.1} parent=5 // pred_check
        %p317 = pneg %p316
      $region46: #{tpu_custom_call.1} parent=5 // pred_check_branch
        %319 = sbr.rel (%p317) target = $region48
      $region47: #{tpu_custom_call.1} parent=5 // pred_region
        // Predicated region
        $region49: #{tpu_custom_call.1} parent=47 // pred_check
          %p320 = pneg %p43
        $region50: #{tpu_custom_call.1} parent=47 // pred_check_branch
          %322 = sbr.rel (%p320) target = $region52
        $region51: #{tpu_custom_call.1} parent=47 // pred_region
          %p323 = scmp.lt.s32.totalorder %s23, 1
          %s324 = scalar_select %p323, %s23, 1
          %s325 = smul.addr %s324, 4
          %s326 = smul.addr %s325, 8
          %s327 = scalar_lea.vmem %s0, %s326
        $region52: #{tpu_custom_call.1} parent=47 // pred_fallthru
          _
        // Predicated region
        $region53: #{tpu_custom_call.1} parent=47 // pred_check
          %p328 = pneg %p69
        $region54: #{tpu_custom_call.1} parent=47 // pred_check_branch
          %330 = sbr.rel (%p328) target = $region56
        $region55: #{tpu_custom_call.1} parent=47 // pred_region
          %s331 = sand.u32 %s59, 1
          %s332 = scalar_lea.sflag [#allocation3], %s331
          %s333 = sand.u32 %s59, 1
          %s334 = smul.addr %s333, 32
          %s335 = scalar_lea.vmem [#allocation2], %s334
          %s337 = ssub.s32 512, 512
          %338 = vsyncadd %s332, %s337
          %s339 = smul.addr %s23, 4
          %s340 = smul.addr %s339, 128
          %s341 = scalar_lea.hbm %s1, %s340
          %s342 = sshll.u32 %s335, 4
          %s343 = int_to_ptr.vmem [resolvable:$true] %s342
          %348 = dma.hbm_to_vmem [thread:$0]  %s341, 512, %s343, %s332, 128, 128, 8
        $region56: #{tpu_custom_call.1} parent=47 // pred_fallthru
          _
      $region48: #{tpu_custom_call.1} parent=5 // pred_fallthru
        _
      %p349 = scmp.le.s32.totalorder 1, %s23
      %p350 = scmp.lt.s32.totalorder %s23, 3
      %p351 = pnand %p349, %p350
      %p352 = pneg %p351
      // Predicated region
      $region57: #{tpu_custom_call.1} parent=5 // pred_check
        _
      $region58: #{tpu_custom_call.1} parent=5 // pred_check_branch
        %354 = sbr.rel (%p351) target = $region60
      $region59: #{tpu_custom_call.1} parent=5 // pred_region
        %s355 = ssub.s32 %s23, 1
        %s356 = sand.u32 %s62, 1
        %s357 = scalar_lea.sflag [#allocation3], %s356
        %s358 = sand.u32 %s62, 1
        %s359 = smul.addr %s358, 32
        %s360 = scalar_lea.vmem [#allocation2], %s359
        // Predicated region
        $region61: #{tpu_custom_call.1} parent=59 // pred_check
          %p361 = pneg %p75
        $region62: #{tpu_custom_call.1} parent=59 // pred_check_branch
          %363 = sbr.rel (%p361) target = $region64
        $region63: #{tpu_custom_call.1} parent=59 // pred_region
          %364 = dma.done %s357, 512
        $region64: #{tpu_custom_call.1} parent=59 // pred_fallthru
          _
        // Predicated region
        $region65: #{tpu_custom_call.1} parent=59 // pred_check
          %p365 = pneg %p159
        $region66: #{tpu_custom_call.1} parent=59 // pred_check_branch
          %367 = sbr.rel (%p365) target = $region68
        $region67: #{tpu_custom_call.1} parent=59 // pred_region
          %368 = dma.done [#allocation6], 16
        $region68: #{tpu_custom_call.1} parent=59 // pred_fallthru
          _
        %p369 = scmp.lt.s32.totalorder %s28, 1
        %s370 = scalar_select %p369, %s28, 1
        %s371 = smul.addr %s370, 4
        %s372 = smul.addr %s371, 8
        %s373 = scalar_lea.vmem %s0, %s372
        %p374 = pneg %p49
        %p375 = pneg %p46
        %s376 = sand.u32 %s62, 1
        %s377 = scalar_lea.sflag [#allocation3], %s376
        %s378 = sand.u32 %s62, 1
        %s379 = smul.addr %s378, 32
        %s380 = scalar_lea.vmem [#allocation2], %s379
        %p381 = pneg %p75
        %p382 = pneg %p72
        %p383 = pneg %p96
        %p384 = pneg %p93
        %p385 = pneg %p117
        %p386 = pneg %p114
        %p387 = pneg %p138
        %p388 = pneg %p135
        %p389 = pneg %p159
        %p390 = pneg %p156
        %p391 = pneg %p180
        %p392 = pneg %p177
        %p393 = pneg %p201
        %p394 = pneg %p198
        %p395 = pneg %p222
        %p396 = pneg %p219
        %p397 = pneg %p243
        %p398 = pneg %p240
        %p399 = pneg %p269
        %p400 = pneg %p266
        %s401 = sand.u32 %s256, 1
        %s402 = scalar_lea.sflag [#allocation4], %s401
        %s403 = sand.u32 %s256, 1
        %s404 = smul.addr %s403, 32
        %s405 = scalar_lea.vmem [#allocation7], %s404
        %p406 = scmp.lt.s32.totalorder %s28, 1
        %s407 = scalar_select %p406, %s28, 1
        %s408 = smul.addr %s407, 4
        %s409 = smul.addr %s408, 8
        %s410 = scalar_lea.vmem %s0, %s409
        %v411 = vld [vmem:[%s410] sm:$0xff]
        %v412 = vld [vmem:[%s410 + $0x8] sm:$0xff]
        %v413 = vld [vmem:[%s410 + $0x10] sm:$0xff]
        %v414 = vld [vmem:[%s410 + $0x18] sm:$0xff]
        %vm415 = vcmask 523264
        %v416 = vsel %vm415, %v411, 0.0
        %417 = vadd.xlane.f32.xlu0 %v416
        %v418 = vpop.xlane.xlu0 %417
        %v419 = vsel %vm415, %v412, 0.0
        %420 = vadd.xlane.f32.xlu0 %v419
        %v421 = vpop.xlane.xlu0 %420
        %v422 = vsel %vm415, %v413, 0.0
        %423 = vadd.xlane.f32.xlu0 %v422
        %v424 = vpop.xlane.xlu0 %423
        %v425 = vsel %vm415, %v414, 0.0
        %426 = vadd.xlane.f32.xlu0 %v425
        %v427 = vpop.xlane.xlu0 %426
        %v428 = vmul.f32 %v418, 0.015625
        %v429 = vmul.f32 %v421, 0.015625
        %v430 = vmul.f32 %v424, 0.015625
        %v431 = vmul.f32 %v427, 0.015625
        %v432 = vld [vmem:[%s2] sm:$0xff]
        %v433 = vld [vmem:[%s2 + $0x8] sm:$0xff]
        %v434 = vld [vmem:[%s2 + $0x10] sm:$0xff]
        %v435 = vld [vmem:[%s2 + $0x18] sm:$0xff]
        %v436 = vld [vmem:[%s3] sm:$0x1]
        %v441 = vlaneseq
        %v442 = vand.u32 %v441, 127
        %v443 = vlaneseq
        %v444 = vshrl.u32 %v443, 7
        %v445 = vsub.s32 %v442, %v444
        %v446 = vrot.slane %v428, %v445
        %v447 = vadd.s32 %v442, 4294967288
        %v448 = vlaneseq
        %v449 = vshrl.u32 %v448, 7
        %v450 = vsub.s32 %v447, %v449
        %v451 = vrot.slane %v429, %v450
        %vm452 = vcmask 130112
        %v453 = vsel %vm452, %v451, %v446
        %v454 = vadd.s32 %v442, 4294967280
        %v455 = vlaneseq
        %v456 = vshrl.u32 %v455, 7
        %v457 = vsub.s32 %v454, %v456
        %v458 = vrot.slane %v430, %v457
        %vm459 = vcmask 195712
        %v460 = vsel %vm459, %v458, %v453
        %v461 = vadd.s32 %v442, 4294967272
        %v462 = vlaneseq
        %v463 = vshrl.u32 %v462, 7
        %v464 = vsub.s32 %v461, %v463
        %v465 = vrot.slane %v431, %v464
        %vm466 = vcmask 261312
        %v467 = vsel %vm466, %v465, %v460
        %vm468 = vcmask 261120
        %v469 = vsel %vm468, %v467, 0
        %471 = vmatprep.subr.mxu0 0.0
        %472 = vmatpush1.msra.mxu0 0.0
        %473 = vmatprep.subr.mxu0 0.0
        %474 = vmatpush1.msra.mxu0 0.0
        %475 = vmatprep.subr.mxu0 0.0
        %476 = vmatpush1.msra.mxu0 0.0
        %477 = vmatprep.subr.mxu0 0.0
        %478 = vmatpush1.msra.mxu0 0.0
        %479 = vmatprep.subr.mxu0 0.0
        %480 = vmatpush1.msra.mxu0 0.0
        %481 = vmatprep.subr.mxu0 0.0
        %482 = vmatpush1.msra.mxu0 0.0
        %483 = vmatprep.subr.mxu0 0.0
        %484 = vmatpush1.msra.mxu0 0.0
        %485 = vmatprep.subr.mxu0 0.0
        %486 = vmatpush1.msra.mxu0 0.0
        %487 = vmatprep.subr.mxu0 0.0
        %488 = vmatpush1.msra.mxu0 0.0
        %489 = vmatprep.subr.mxu0 0.0
        %490 = vmatpush1.msra.mxu0 0.0
        %491 = vmatprep.subr.mxu0 0.0
        %492 = vmatpush1.msra.mxu0 0.0
        %493 = vmatprep.subr.mxu0 0.0
        %494 = vmatpush1.msra.mxu0 0.0
        %495 = vmatprep.subr.mxu0 0.0
        %496 = vmatpush1.msra.mxu0 %v435
        %497 = vmatprep.subr.mxu0 0.0
        %498 = vmatpush1.msra.mxu0 %v434
        %499 = vmatprep.subr.mxu0 0.0
        %500 = vmatpush1.msra.mxu0 %v433
        %501 = vmatprep.subr.mxu0 0.0
        %502 = vmatpush1.msra.mxu0 %v432
        %503 = vmatprep.subr.mxu0 0.0
        %504 = vmatpush2.msra.mxu0 0.0
        %505 = vmatprep.subr.mxu0 0.0
        %506 = vmatpush2.msra.mxu0 0.0
        %507 = vmatprep.subr.mxu0 0.0
        %508 = vmatpush2.msra.mxu0 0.0
        %509 = vmatprep.subr.mxu0 0.0
        %510 = vmatpush2.msra.mxu0 0.0
        %511 = vmatprep.subr.mxu0 0.0
        %512 = vmatpush2.msra.mxu0 0.0
        %513 = vmatprep.subr.mxu0 0.0
        %514 = vmatpush2.msra.mxu0 0.0
        %515 = vmatprep.subr.mxu0 0.0
        %516 = vmatpush2.msra.mxu0 0.0
        %517 = vmatprep.subr.mxu0 0.0
        %518 = vmatpush2.msra.mxu0 0.0
        %519 = vmatprep.subr.mxu0 0.0
        %520 = vmatpush2.msra.mxu0 0.0
        %521 = vmatprep.subr.mxu0 0.0
        %522 = vmatpush2.msra.mxu0 0.0
        %523 = vmatprep.subr.mxu0 0.0
        %524 = vmatpush2.msra.mxu0 0.0
        %525 = vmatprep.subr.mxu0 0.0
        %526 = vmatpush2.msra.mxu0 0.0
        %527 = vmatprep.subr.mxu0 0.0
        %528 = vmatpush2.msra.mxu0 0.0
        %529 = vmatprep.subr.mxu0 0.0
        %530 = vmatpush2.msra.mxu0 0.0
        %531 = vmatprep.subr.mxu0 0.0
        %532 = vmatpush2.msra.mxu0 0.0
        %533 = vmatprep.subr.mxu0 0.0
        %534 = vmatpush2.msra.mxu0 0.0
        %535 = vmatprep.mubr.f32.mxu0 0.0
        %536 = vmatmul.mubr.f32.gmra.mxu0 %v469
        %v537 = vpop.f32.mrf.mxu0
        %v538 = vadd.f32 %v436, %v537
        %v539 = vpop.f32.mrf.mxu0
        %540 = vdwg.mxu0
        %v541 = vmax.f32 %v538, 0.0
        %v542 = vld [vmem:[%s4] sm:$0xff]
        %v543 = vld [vmem:[#allocation5] sm:$0x1]
        %vm544 = vcmask 64512
        %v546 = vsel %vm544, %v541, 0
        %548 = vmatprep.subr.mxu0 0.0
        %549 = vmatpush1.msra.mxu0 0.0
        %550 = vmatprep.subr.mxu0 0.0
        %551 = vmatpush1.msra.mxu0 0.0
        %552 = vmatprep.subr.mxu0 0.0
        %553 = vmatpush1.msra.mxu0 0.0
        %554 = vmatprep.subr.mxu0 0.0
        %555 = vmatpush1.msra.mxu0 0.0
        %556 = vmatprep.subr.mxu0 0.0
        %557 = vmatpush1.msra.mxu0 0.0
        %558 = vmatprep.subr.mxu0 0.0
        %559 = vmatpush1.msra.mxu0 0.0
        %560 = vmatprep.subr.mxu0 0.0
        %561 = vmatpush1.msra.mxu0 0.0
        %562 = vmatprep.subr.mxu0 0.0
        %563 = vmatpush1.msra.mxu0 0.0
        %564 = vmatprep.subr.mxu0 0.0
        %565 = vmatpush1.msra.mxu0 0.0
        %566 = vmatprep.subr.mxu0 0.0
        %567 = vmatpush1.msra.mxu0 0.0
        %568 = vmatprep.subr.mxu0 0.0
        %569 = vmatpush1.msra.mxu0 0.0
        %570 = vmatprep.subr.mxu0 0.0
        %571 = vmatpush1.msra.mxu0 0.0
        %572 = vmatprep.subr.mxu0 0.0
        %573 = vmatpush1.msra.mxu0 0.0
        %574 = vmatprep.subr.mxu0 0.0
        %575 = vmatpush1.msra.mxu0 0.0
        %576 = vmatprep.subr.mxu0 0.0
        %577 = vmatpush1.msra.mxu0 0.0
        %578 = vmatprep.subr.mxu0 0.0
        %579 = vmatpush1.msra.mxu0 %v542
        %580 = vmatprep.subr.mxu0 0.0
        %581 = vmatpush2.msra.mxu0 0.0
        %582 = vmatprep.subr.mxu0 0.0
        %583 = vmatpush2.msra.mxu0 0.0
        %584 = vmatprep.subr.mxu0 0.0
        %585 = vmatpush2.msra.mxu0 0.0
        %586 = vmatprep.subr.mxu0 0.0
        %587 = vmatpush2.msra.mxu0 0.0
        %588 = vmatprep.subr.mxu0 0.0
        %589 = vmatpush2.msra.mxu0 0.0
        %590 = vmatprep.subr.mxu0 0.0
        %591 = vmatpush2.msra.mxu0 0.0
        %592 = vmatprep.subr.mxu0 0.0
        %593 = vmatpush2.msra.mxu0 0.0
        %594 = vmatprep.subr.mxu0 0.0
        %595 = vmatpush2.msra.mxu0 0.0
        %596 = vmatprep.subr.mxu0 0.0
        %597 = vmatpush2.msra.mxu0 0.0
        %598 = vmatprep.subr.mxu0 0.0
        %599 = vmatpush2.msra.mxu0 0.0
        %600 = vmatprep.subr.mxu0 0.0
        %601 = vmatpush2.msra.mxu0 0.0
        %602 = vmatprep.subr.mxu0 0.0
        %603 = vmatpush2.msra.mxu0 0.0
        %604 = vmatprep.subr.mxu0 0.0
        %605 = vmatpush2.msra.mxu0 0.0
        %606 = vmatprep.subr.mxu0 0.0
        %607 = vmatpush2.msra.mxu0 0.0
        %608 = vmatprep.subr.mxu0 0.0
        %609 = vmatpush2.msra.mxu0 0.0
        %610 = vmatprep.subr.mxu0 0.0
        %611 = vmatpush2.msra.mxu0 0.0
        %612 = vmatprep.mubr.f32.mxu0 0.0
        %613 = vmatmul.mubr.f32.gmra.mxu0 %v546
        %v614 = vpop.f32.mrf.mxu0
        %v615 = vadd.f32 %v543, %v614
        %v616 = vpop.f32.mrf.mxu0
        %617 = vdwg.mxu0
        %v618 = vxor.u32 %v615, 2147483648
        %v619 = vmul.f32 %v618, 1.442695
        %v620 = vpow.pop %v619
        %v621 = vadd.f32 %v620, 1.0
        %v622 = vrcp.pop %v621
        %v623 = vmul.f32 1.0, %v622
        %v624 = vld [vmem:[%s360] sm:$0xff]
        %v625 = vld [vmem:[%s360 + $0x8] sm:$0xff]
        %v626 = vld [vmem:[%s360 + $0x10] sm:$0xff]
        %v627 = vld [vmem:[%s360 + $0x18] sm:$0xff]
        %v628 = vsel %vm415, %v624, 0.0
        %629 = vadd.xlane.f32.xlu0 %v628
        %v630 = vpop.xlane.xlu0 %629
        %v631 = vsel %vm415, %v625, 0.0
        %632 = vadd.xlane.f32.xlu0 %v631
        %v633 = vpop.xlane.xlu0 %632
        %v634 = vsel %vm415, %v626, 0.0
        %635 = vadd.xlane.f32.xlu0 %v634
        %v636 = vpop.xlane.xlu0 %635
        %v637 = vsel %vm415, %v627, 0.0
        %638 = vadd.xlane.f32.xlu0 %v637
        %v639 = vpop.xlane.xlu0 %638
        %v640 = vmul.f32 %v630, 0.015625
        %v641 = vmul.f32 %v633, 0.015625
        %v642 = vmul.f32 %v636, 0.015625
        %v643 = vmul.f32 %v639, 0.015625
        %v644 = vld [vmem:[%s6] sm:$0xff]
        %v645 = vld [vmem:[%s6 + $0x8] sm:$0xff]
        %v646 = vld [vmem:[%s6 + $0x10] sm:$0xff]
        %v647 = vld [vmem:[%s6 + $0x18] sm:$0xff]
        %v648 = vld [vmem:[%s7] sm:$0x1]
        %v653 = vlaneseq
        %v654 = vshrl.u32 %v653, 7
        %v655 = vsub.s32 %v442, %v654
        %v656 = vrot.slane %v640, %v655
        %v657 = vlaneseq
        %v658 = vshrl.u32 %v657, 7
        %v659 = vsub.s32 %v447, %v658
        %v660 = vrot.slane %v641, %v659
        %v661 = vsel %vm452, %v660, %v656
        %v662 = vlaneseq
        %v663 = vshrl.u32 %v662, 7
        %v664 = vsub.s32 %v454, %v663
        %v665 = vrot.slane %v642, %v664
        %v666 = vsel %vm459, %v665, %v661
        %v667 = vlaneseq
        %v668 = vshrl.u32 %v667, 7
        %v669 = vsub.s32 %v461, %v668
        %v670 = vrot.slane %v643, %v669
        %v671 = vsel %vm466, %v670, %v666
        %v672 = vsel %vm468, %v671, 0
        %674 = vmatprep.subr.mxu0 0.0
        %675 = vmatpush1.msra.mxu0 0.0
        %676 = vmatprep.subr.mxu0 0.0
        %677 = vmatpush1.msra.mxu0 0.0
        %678 = vmatprep.subr.mxu0 0.0
        %679 = vmatpush1.msra.mxu0 0.0
        %680 = vmatprep.subr.mxu0 0.0
        %681 = vmatpush1.msra.mxu0 0.0
        %682 = vmatprep.subr.mxu0 0.0
        %683 = vmatpush1.msra.mxu0 0.0
        %684 = vmatprep.subr.mxu0 0.0
        %685 = vmatpush1.msra.mxu0 0.0
        %686 = vmatprep.subr.mxu0 0.0
        %687 = vmatpush1.msra.mxu0 0.0
        %688 = vmatprep.subr.mxu0 0.0
        %689 = vmatpush1.msra.mxu0 0.0
        %690 = vmatprep.subr.mxu0 0.0
        %691 = vmatpush1.msra.mxu0 0.0
        %692 = vmatprep.subr.mxu0 0.0
        %693 = vmatpush1.msra.mxu0 0.0
        %694 = vmatprep.subr.mxu0 0.0
        %695 = vmatpush1.msra.mxu0 0.0
        %696 = vmatprep.subr.mxu0 0.0
        %697 = vmatpush1.msra.mxu0 0.0
        %698 = vmatprep.subr.mxu0 0.0
        %699 = vmatpush1.msra.mxu0 %v647
        %700 = vmatprep.subr.mxu0 0.0
        %701 = vmatpush1.msra.mxu0 %v646
        %702 = vmatprep.subr.mxu0 0.0
        %703 = vmatpush1.msra.mxu0 %v645
        %704 = vmatprep.subr.mxu0 0.0
        %705 = vmatpush1.msra.mxu0 %v644
        %706 = vmatprep.subr.mxu0 0.0
        %707 = vmatpush2.msra.mxu0 0.0
        %708 = vmatprep.subr.mxu0 0.0
        %709 = vmatpush2.msra.mxu0 0.0
        %710 = vmatprep.subr.mxu0 0.0
        %711 = vmatpush2.msra.mxu0 0.0
        %712 = vmatprep.subr.mxu0 0.0
        %713 = vmatpush2.msra.mxu0 0.0
        %714 = vmatprep.subr.mxu0 0.0
        %715 = vmatpush2.msra.mxu0 0.0
        %716 = vmatprep.subr.mxu0 0.0
        %717 = vmatpush2.msra.mxu0 0.0
        %718 = vmatprep.subr.mxu0 0.0
        %719 = vmatpush2.msra.mxu0 0.0
        %720 = vmatprep.subr.mxu0 0.0
        %721 = vmatpush2.msra.mxu0 0.0
        %722 = vmatprep.subr.mxu0 0.0
        %723 = vmatpush2.msra.mxu0 0.0
        %724 = vmatprep.subr.mxu0 0.0
        %725 = vmatpush2.msra.mxu0 0.0
        %726 = vmatprep.subr.mxu0 0.0
        %727 = vmatpush2.msra.mxu0 0.0
        %728 = vmatprep.subr.mxu0 0.0
        %729 = vmatpush2.msra.mxu0 0.0
        %730 = vmatprep.subr.mxu0 0.0
        %731 = vmatpush2.msra.mxu0 0.0
        %732 = vmatprep.subr.mxu0 0.0
        %733 = vmatpush2.msra.mxu0 0.0
        %734 = vmatprep.subr.mxu0 0.0
        %735 = vmatpush2.msra.mxu0 0.0
        %736 = vmatprep.subr.mxu0 0.0
        %737 = vmatpush2.msra.mxu0 0.0
        %738 = vmatprep.mubr.f32.mxu0 0.0
        %739 = vmatmul.mubr.f32.gmra.mxu0 %v672
        %v740 = vpop.f32.mrf.mxu0
        %v741 = vadd.f32 %v648, %v740
        %v742 = vpop.f32.mrf.mxu0
        %743 = vdwg.mxu0
        %v744 = vmax.f32 %v741, 0.0
        %v745 = vld [vmem:[%s8] sm:$0xff]
        %v746 = vld [vmem:[%s9] sm:$0x1]
        %v748 = vsel %vm544, %v744, 0
        %750 = vmatprep.subr.mxu0 0.0
        %751 = vmatpush1.msra.mxu0 0.0
        %752 = vmatprep.subr.mxu0 0.0
        %753 = vmatpush1.msra.mxu0 0.0
        %754 = vmatprep.subr.mxu0 0.0
        %755 = vmatpush1.msra.mxu0 0.0
        %756 = vmatprep.subr.mxu0 0.0
        %757 = vmatpush1.msra.mxu0 0.0
        %758 = vmatprep.subr.mxu0 0.0
        %759 = vmatpush1.msra.mxu0 0.0
        %760 = vmatprep.subr.mxu0 0.0
        %761 = vmatpush1.msra.mxu0 0.0
        %762 = vmatprep.subr.mxu0 0.0
        %763 = vmatpush1.msra.mxu0 0.0
        %764 = vmatprep.subr.mxu0 0.0
        %765 = vmatpush1.msra.mxu0 0.0
        %766 = vmatprep.subr.mxu0 0.0
        %767 = vmatpush1.msra.mxu0 0.0
        %768 = vmatprep.subr.mxu0 0.0
        %769 = vmatpush1.msra.mxu0 0.0
        %770 = vmatprep.subr.mxu0 0.0
        %771 = vmatpush1.msra.mxu0 0.0
        %772 = vmatprep.subr.mxu0 0.0
        %773 = vmatpush1.msra.mxu0 0.0
        %774 = vmatprep.subr.mxu0 0.0
        %775 = vmatpush1.msra.mxu0 0.0
        %776 = vmatprep.subr.mxu0 0.0
        %777 = vmatpush1.msra.mxu0 0.0
        %778 = vmatprep.subr.mxu0 0.0
        %779 = vmatpush1.msra.mxu0 0.0
        %780 = vmatprep.subr.mxu0 0.0
        %781 = vmatpush1.msra.mxu0 %v745
        %782 = vmatprep.subr.mxu0 0.0
        %783 = vmatpush2.msra.mxu0 0.0
        %784 = vmatprep.subr.mxu0 0.0
        %785 = vmatpush2.msra.mxu0 0.0
        %786 = vmatprep.subr.mxu0 0.0
        %787 = vmatpush2.msra.mxu0 0.0
        %788 = vmatprep.subr.mxu0 0.0
        %789 = vmatpush2.msra.mxu0 0.0
        %790 = vmatprep.subr.mxu0 0.0
        %791 = vmatpush2.msra.mxu0 0.0
        %792 = vmatprep.subr.mxu0 0.0
        %793 = vmatpush2.msra.mxu0 0.0
        %794 = vmatprep.subr.mxu0 0.0
        %795 = vmatpush2.msra.mxu0 0.0
        %796 = vmatprep.subr.mxu0 0.0
        %797 = vmatpush2.msra.mxu0 0.0
        %798 = vmatprep.subr.mxu0 0.0
        %799 = vmatpush2.msra.mxu0 0.0
        %800 = vmatprep.subr.mxu0 0.0
        %801 = vmatpush2.msra.mxu0 0.0
        %802 = vmatprep.subr.mxu0 0.0
        %803 = vmatpush2.msra.mxu0 0.0
        %804 = vmatprep.subr.mxu0 0.0
        %805 = vmatpush2.msra.mxu0 0.0
        %806 = vmatprep.subr.mxu0 0.0
        %807 = vmatpush2.msra.mxu0 0.0
        %808 = vmatprep.subr.mxu0 0.0
        %809 = vmatpush2.msra.mxu0 0.0
        %810 = vmatprep.subr.mxu0 0.0
        %811 = vmatpush2.msra.mxu0 0.0
        %812 = vmatprep.subr.mxu0 0.0
        %813 = vmatpush2.msra.mxu0 0.0
        %814 = vmatprep.mubr.f32.mxu0 0.0
        %815 = vmatmul.mubr.f32.gmra.mxu0 %v748
        %v816 = vpop.f32.mrf.mxu0
        %v817 = vadd.f32 %v746, %v816
        %v818 = vpop.f32.mrf.mxu0
        %819 = vdwg.mxu0
        %v820 = vxor.u32 %v817, 2147483648
        %v821 = vmul.f32 %v820, 1.442695
        %v822 = vpow.pop %v821
        %v823 = vadd.f32 %v822, 1.0
        %v824 = vrcp.pop %v823
        %v825 = vmul.f32 1.0, %v824
        %v826 = vlaneseq
        %v827 = vshrl.u32 %v826, 7
        %v828 = vsub.s32 0, %v827
        %v829 = vrot.slane %v623, %v828
        %831 = vbcast.lane.b32.xlu0 %v829, 256
        %v832 = vpop.permute.xlu0 %831
        %s834 = sor.u32 256, 8
        %835 = vbcast.lane.b32.xlu0 %v829, %s834
        %v836 = vpop.permute.xlu0 %835
        %s838 = sor.u32 256, 16
        %839 = vbcast.lane.b32.xlu0 %v829, %s838
        %v840 = vpop.permute.xlu0 %839
        %s842 = sor.u32 256, 24
        %843 = vbcast.lane.b32.xlu0 %v829, %s842
        %v844 = vpop.permute.xlu0 %843
        %v845 = vmul.f32 %v411, %v832
        %v846 = vmul.f32 %v412, %v836
        %v847 = vmul.f32 %v413, %v840
        %v848 = vmul.f32 %v414, %v844
        %v849 = vlaneseq
        %v850 = vshrl.u32 %v849, 7
        %v851 = vsub.s32 0, %v850
        %v852 = vrot.slane %v825, %v851
        %854 = vbcast.lane.b32.xlu0 %v852, 256
        %v855 = vpop.permute.xlu0 %854
        %s857 = sor.u32 256, 8
        %858 = vbcast.lane.b32.xlu0 %v852, %s857
        %v859 = vpop.permute.xlu0 %858
        %s861 = sor.u32 256, 16
        %862 = vbcast.lane.b32.xlu0 %v852, %s861
        %v863 = vpop.permute.xlu0 %862
        %s865 = sor.u32 256, 24
        %866 = vbcast.lane.b32.xlu0 %v852, %s865
        %v867 = vpop.permute.xlu0 %866
        %v868 = vmul.f32 %v624, %v855
        %v869 = vmul.f32 %v625, %v859
        %v870 = vmul.f32 %v626, %v863
        %v871 = vmul.f32 %v627, %v867
        %v872 = vadd.f32 %v845, %v868
        %v873 = vadd.f32 %v846, %v869
        %v874 = vadd.f32 %v847, %v870
        %v875 = vadd.f32 %v848, %v871
        %876 = vst.msk [vmem:[%s405] sm:$0xff] %vm415, %v872
        %877 = vst.msk [vmem:[%s405 + $0x8] sm:$0xff] %vm415, %v873
        %878 = vst.msk [vmem:[%s405 + $0x10] sm:$0xff] %vm415, %v874
        %879 = vst.msk [vmem:[%s405 + $0x18] sm:$0xff] %vm415, %v875
        %s880 = sand.u32 %s256, 1
        %s881 = scalar_lea.sflag [#allocation4], %s880
        %s882 = sand.u32 %s256, 1
        %s883 = smul.addr %s882, 32
        %s884 = scalar_lea.vmem [#allocation7], %s883
        // Predicated region
        $region69: #{tpu_custom_call.1} parent=59 // pred_check
          %p885 = pneg %p266
        $region70: #{tpu_custom_call.1} parent=59 // pred_check_branch
          %887 = sbr.rel (%p885) target = $region72
        $region71: #{tpu_custom_call.1} parent=59 // pred_region
          %s889 = ssub.s32 512, 512
          %890 = vsyncadd %s881, %s889
          %s891 = smul.addr %s28, 4
          %s892 = smul.addr %s891, 128
          %s893 = scalar_lea.hbm %s10, %s892
          %s894 = sshll.u32 %s884, 4
          %s895 = int_to_ptr.vmem [resolvable:$true] %s894
          %900 = dma.vmem_to_hbm [thread:$0]  %s895, 512, %s893, %s881, 128, 128, 8
        $region72: #{tpu_custom_call.1} parent=59 // pred_fallthru
          _
      $region60: #{tpu_custom_call.1} parent=5 // pred_fallthru
        _
      %p901 = scmp.le.s32.totalorder 2, %s23
      // Predicated region
      $region73: #{tpu_custom_call.1} parent=5 // pred_check
        %p902 = pneg %p901
      $region74: #{tpu_custom_call.1} parent=5 // pred_check_branch
        %904 = sbr.rel (%p902) target = $region76
      $region75: #{tpu_custom_call.1} parent=5 // pred_region
        %s905 = ssub.s32 %s23, 2
        // Predicated region
        $region77: #{tpu_custom_call.1} parent=75 // pred_check
          %p906 = pneg %p272
        $region78: #{tpu_custom_call.1} parent=75 // pred_check_branch
          %908 = sbr.rel (%p906) target = $region80
        $region79: #{tpu_custom_call.1} parent=75 // pred_region
          %s909 = sand.u32 %s257, 1
          %s910 = scalar_lea.sflag [#allocation4], %s909
          %s911 = sand.u32 %s257, 1
          %s912 = smul.addr %s911, 32
          %s913 = scalar_lea.vmem [#allocation7], %s912
          %914 = dma.done %s910, 512
        $region80: #{tpu_custom_call.1} parent=75 // pred_fallthru
          _
      $region76: #{tpu_custom_call.1} parent=5 // pred_fallthru
        _
    $region6: #{tpu_custom_call.1} parent=1 // loop_footer
      %s27 = sadd.s32 1, %s23
    $region7: #{tpu_custom_call.1} parent=1 // loop_footer_branch
      %22 = sbr.rel target = $region3
    $region8: #{tpu_custom_call.1} parent=1 // loop_exit
      _
    %915 = vsyncpa [#allocation3], 1
    %s916 = scalar_lea.sflag [#allocation3], 1
    %917 = vsyncpa %s916, 1
    %918 = vsyncpa [#allocation6], 1
    %919 = vsyncpa [#allocation4], 1
    %s920 = scalar_lea.sflag [#allocation4], 1
    %921 = vsyncpa %s920, 1

</llo_original>
